<compile_context>
chip_gen: v7x
topology: tpu7x:2x2x1
jax: 0.10.0
libtpu: 0.0.40
codegen_flags: <defaults>
</compile_context>

<pallas_src>
import functools

import jax
import jax.numpy as jnp
from jax.experimental import pallas as pl
from jax.experimental.pallas import tpu as pltpu


# ----------------------------- in-kernel helpers -----------------------------

def _elu(x):
    # torch.nn.ELU(alpha=1): x if x > 0 else exp(x) - 1
    return jnp.where(x > 0, x, jnp.exp(jnp.minimum(x, 0.0)) - 1.0)


def _instance_norm(x, gamma, beta, eps=1e-6):
    # x: (H*W, C); per-channel stats over the spatial axis (biased variance),
    # matching torch.nn.InstanceNorm2d(affine=True, track_running_stats=False).
    mu = jnp.mean(x, axis=0, keepdims=True)
    var = jnp.mean((x - mu) ** 2, axis=0, keepdims=True)
    return (x - mu) * jax.lax.rsqrt(var + eps) * gamma + beta


def _full_spec(shape):
    # whole-array block, constant across the grid
    return pl.BlockSpec(shape, lambda *_: (0,) * len(shape))


# --------------------- kernel A: proj_1 (msa -> xd) + feat_1d ---------------------

def _msa_feat_kernel(msa_ref, w1_ref, b1_ref, xd_ref, feat1d_ref):
    _, N, L, F = msa_ref.shape
    P = w1_ref.shape[1]

    x = msa_ref[0]                                                   # (N, L, F)
    xd = jnp.dot(x.reshape(N * L, F), w1_ref[...],
                 preferred_element_type=jnp.float32) + b1_ref[...]   # proj_1
    xd_ref[0] = xd.reshape(N, L, P).astype(xd_ref.dtype)

    # feat_1d = concat(mean over N, first sequence)
    feat_mean = jnp.mean(x, axis=0)                                  # (L, F)
    query = x[0]                                                     # (L, F)
    feat1d_ref[0] = jnp.concatenate([feat_mean, query], axis=-1).astype(feat1d_ref.dtype)


def _msa_features(msa, w1, b1):
    B, N, L, F = msa.shape
    P = w1.shape[1]
    return pl.pallas_call(
        _msa_feat_kernel,
        out_shape=(jax.ShapeDtypeStruct((B, N, L, P), jnp.float32),
                   jax.ShapeDtypeStruct((B, L, 2 * F), jnp.float32)),
        grid=(B,),
        in_specs=[
            pl.BlockSpec((1, N, L, F), lambda b: (b, 0, 0, 0)),
            _full_spec((F, P)),
            _full_spec((1, P)),
        ],
        out_specs=[
            pl.BlockSpec((1, N, L, P), lambda b: (b, 0, 0, 0)),
            pl.BlockSpec((1, L, 2 * F), lambda b: (b, 0, 0)),
        ],
        compiler_params=pltpu.CompilerParams(dimension_semantics=("parallel",)),
    )(msa, w1, b1.reshape(1, P))


# --------- kernel B: outer product (single MXU matmul) -> LayerNorm -> proj_2 ---------

def _pair_proj_kernel(xdt_ref, xdf_ref, lng_ref, lnb_ref, w2_ref, b2_ref, out_ref, *, P):
    _, N, TIP = xdt_ref.shape
    _, _, LP = xdf_ref.shape
    TI = TIP // P
    L = LP // P
    Co = w2_ref.shape[1]
    inv_n = 1.0 / float(N)

    # einsum('abij,ablm->ailjm', xd, xd/N) for the i row-tile, as one MXU contraction over N:
    # g[(i,j), (l,m)] = sum_n xd[n,i,j] * xd[n,l,m] / N
    lhs = xdt_ref[0] * inv_n                                         # (N, TI*P)
    rhs = xdf_ref[0]                                                 # (N, L*P)
    g = jax.lax.dot_general(lhs, rhs, (((0,), (0,)), ((), ())),
                            preferred_element_type=jnp.float32)      # (TI*P, L*P)

    # reorder (i,j,l,m) -> (i,l,j,m): per-(i,l) rows of P*P channels
    g = jnp.transpose(g.reshape(TI, P, L, P), (0, 2, 1, 3)).reshape(TI * L, P * P)

    # LayerNorm over the last (P*P) axis, eps=1e-5 (torch default), biased variance.
    mu = jnp.mean(g, axis=-1, keepdims=True)
    var = jnp.mean((g - mu) ** 2, axis=-1, keepdims=True)
    gn = (g - mu) * jax.lax.rsqrt(var + 1e-5) * lng_ref[...] + lnb_ref[...]

    pair = jnp.dot(gn, w2_ref[...], preferred_element_type=jnp.float32) + b2_ref[...]   # proj_2
    out_ref[0] = pair.reshape(TI, L, Co).astype(out_ref.dtype)


def _pair_projection(xd_flat, ln_g, ln_b, w2, b2, *, L, P, TI):
    B, N, LP = xd_flat.shape
    PP = P * P
    Co = w2.shape[1]
    return pl.pallas_call(
        functools.partial(_pair_proj_kernel, P=P),
        out_shape=jax.ShapeDtypeStruct((B, L, L, Co), jnp.float32),
        grid=(B, L // TI),
        in_specs=[
            pl.BlockSpec((1, N, TI * P), lambda b, i: (b, 0, i)),   # xd row-tile  (lane-blocked)
            pl.BlockSpec((1, N, L * P), lambda b, i: (b, 0, 0)),    # xd full (fetched once per b)
            _full_spec((1, PP)),
            _full_spec((1, PP)),
            _full_spec((PP, Co)),
            _full_spec((1, Co)),
        ],
        out_specs=pl.BlockSpec((1, TI, L, Co), lambda b, i: (b, i, 0, 0)),
        compiler_params=pltpu.CompilerParams(
            dimension_semantics=("parallel", "parallel"),
            vmem_limit_bytes=64 * 1024 * 1024),
    )(xd_flat, xd_flat, ln_g.reshape(1, PP), ln_b.reshape(1, PP), w2, b2.reshape(1, Co))


# --------- kernel C: ResidualNetwork update (fused 1x1 conv + IN + ELU + ResBlock2D) ---------

def _resnet_update_kernel(po_ref, pp_ref, f1_ref,
                          wpo_ref, wpp_ref, wl_ref, wr_ref, g0_ref, b0_ref,
                          wc1_ref, g1_ref, b1_ref,
                          wc2_ref, g2_ref, b2_ref,
                          out_ref, pad_ref, acc_ref, res_ref):
    _, L, _, Co = po_ref.shape
    Cb = wpo_ref.shape[1]

    # ---- 1x1 projection conv (bias=False) fused over the virtual concat
    #      [pair_orig | pair_proj | left | right]; left/right are rank-1 in space so their
    #      contribution is a (L, Cb) matmul broadcast along the other spatial axis. ----
    h = jnp.dot(po_ref[0].reshape(L * L, Co), wpo_ref[...], preferred_element_type=jnp.float32)
    h = h + jnp.dot(pp_ref[0].reshape(L * L, Co), wpp_ref[...], preferred_element_type=jnp.float32)
    f1 = f1_ref[0]                                                        # (L, 2F)
    left_c = jnp.dot(f1, wl_ref[...], preferred_element_type=jnp.float32)   # depends on row i
    right_c = jnp.dot(f1, wr_ref[...], preferred_element_type=jnp.float32)  # depends on col l
    h = (h.reshape(L, L, Cb) + left_c[:, None, :] + right_c[None, :, :]).reshape(L * L, Cb)
    h = _elu(_instance_norm(h, g0_ref[...], b0_ref[...]))
    res_ref[...] = h

    # zero the padded buffer once per grid step; every conv overwrites the interior, so the
    # 1-element border stays zero (no per-conv re-zeroing).
    pad_ref[...] = jnp.zeros_like(pad_ref)

    def conv3x3(v, w_ref):
        # zero-padded 3x3 conv (dilation=1) as 9 shifted matmuls, accumulated in VMEM scratch
        pad_ref[1:L + 1, 1:L + 1, :] = v.reshape(L, L, Cb)
        acc_ref[...] = jnp.zeros_like(acc_ref)
        for dy in range(3):
            for dx in range(3):
                patch = pad_ref[dy:dy + L, dx:dx + L, :]                  # (L, L, Cb)
                acc_ref[...] += jnp.dot(patch.reshape(L * L, Cb),
                                        w_ref[3 * dy + dx],
                                        preferred_element_type=jnp.float32)
        return acc_ref[...]

    h1 = _elu(_instance_norm(conv3x3(res_ref[...], wc1_ref), g1_ref[...], b1_ref[...]))
    # TODO(synk): dropout between the two convs is identity in eval mode.
    h2 = _instance_norm(conv3x3(h1, wc2_ref), g2_ref[...], b2_ref[...])
    out = _elu(res_ref[...] + h2)
    out_ref[0] = out.reshape(L, L, Cb).astype(out_ref.dtype)


def _resnet_update(pair_orig, pair_proj, feat_1d,
                   w0_po, w0_pp, w0_left, w0_right, g0, b0,
                   wc1, g1, b1, wc2, g2, b2):
    B, L, _, Co = pair_orig.shape
    F2 = feat_1d.shape[-1]
    Cb = w0_po.shape[1]
    return pl.pallas_call(
        _resnet_update_kernel,
        out_shape=jax.ShapeDtypeStruct((B, L, L, Cb), jnp.float32),
        grid=(B,),
        in_specs=[
            pl.BlockSpec((1, L, L, Co), lambda b: (b, 0, 0, 0)),
            pl.BlockSpec((1, L, L, Co), lambda b: (b, 0, 0, 0)),
            pl.BlockSpec((1, L, F2), lambda b: (b, 0, 0)),
            _full_spec((Co, Cb)), _full_spec((Co, Cb)),
            _full_spec((F2, Cb)), _full_spec((F2, Cb)),
            _full_spec((1, Cb)), _full_spec((1, Cb)),
            _full_spec((9, Cb, Cb)), _full_spec((1, Cb)), _full_spec((1, Cb)),
            _full_spec((9, Cb, Cb)), _full_spec((1, Cb)), _full_spec((1, Cb)),
        ],
        out_specs=pl.BlockSpec((1, L, L, Cb), lambda b: (b, 0, 0, 0)),
        scratch_shapes=[
            pltpu.VMEM((L + 2, L + 2, Cb), jnp.float32),   # padded conv buffer
            pltpu.VMEM((L * L, Cb), jnp.float32),          # conv tap accumulator
            pltpu.VMEM((L * L, Cb), jnp.float32),          # residual branch
        ],
        compiler_params=pltpu.CompilerParams(
            dimension_semantics=("parallel",),
            vmem_limit_bytes=64 * 1024 * 1024),
    )(pair_orig, pair_proj, feat_1d,
      w0_po, w0_pp, w0_left, w0_right, g0.reshape(1, Cb), b0.reshape(1, Cb),
      wc1, g1.reshape(1, Cb), b1.reshape(1, Cb),
      wc2, g2.reshape(1, Cb), b2.reshape(1, Cb))


# ----------------------------- host-side glue -----------------------------

def msa2pair_forward(msa, pair_orig, p, *, row_tile=8):
    B, N, L, F = msa.shape
    P = p["w1"].shape[1]

    xd, feat_1d = _msa_features(msa, p["w1"], p["b1"])           # (B,N,L,P), (B,L,2F)
    xd_flat = xd.reshape(B, N, L * P)                            # free host reshape (row-major)

    TI = min(row_tile, L)                                        # must divide L; multiple of 8
    pair_proj = _pair_projection(xd_flat, p["ln_g"], p["ln_b"], p["w2"], p["b2"],
                                 L=L, P=P, TI=TI)                # (B, L, L, Co)

    # No pair_cat materialization: the 1x1 conv of the update is fused over the four sources.
    return _resnet_update(pair_orig, pair_proj, feat_1d,
                          p["w0_po"], p["w0_pp"], p["w0_left"], p["w0_right"],
                          p["in0_g"], p["in0_b"],
                          p["wc1"], p["in1_g"], p["in1_b"],
                          p["wc2"], p["in2_g"], p["in2_b"])


def init_params(key, n_feat, n_feat_out, n_feat_proj):
    F, Co, P = n_feat, n_feat_out, n_feat_proj
    Cb = Co                        # ResidualNetwork block width == n_feat_out
    Cin = 2 * Co + 4 * F           # channels entering `update`
    ks = jax.random.split(key, 16)
    r = lambda k, shape, s=0.1: s * jax.random.normal(k, shape, jnp.float32)

    # synthetic parameters generated in PyTorch layouts, then converted
    proj1_w = r(ks[0], (P, F));            proj1_b = r(ks[1], (P,))        # nn.Linear(F, P)
    ln_g = 1.0 + r(ks[2], (P * P,));       ln_b = r(ks[3], (P * P,))       # nn.LayerNorm(P*P)
    proj2_w = r(ks[4], (Co, P * P));       proj2_b = r(ks[5], (Co,))       # nn.Linear(P*P, Co)
    conv0_w = r(ks[6], (Cb, Cin, 1, 1))                                    # Conv2d(Cin, Cb, 1), OIHW
    in0_g = 1.0 + r(ks[7], (Cb,));         in0_b = r(ks[8], (Cb,))
    conv1_w = r(ks[9], (Cb, Cb, 3, 3))                                     # Conv2d 3x3, OIHW
    in1_g = 1.0 + r(ks[10], (Cb,));        in1_b = r(ks[11], (Cb,))
    conv2_w = r(ks[12], (Cb, Cb, 3, 3))                                    # Conv2d 3x3, OIHW
    in2_g = 1.0 + r(ks[13], (Cb,));        in2_b = r(ks[14], (Cb,))

    w0 = conv0_w[:, :, 0, 0].T                                             # (Cin, Cb)
    return dict(
        w1=proj1_w.T, b1=proj1_b, ln_g=ln_g, ln_b=ln_b,
        w2=proj2_w.T, b2=proj2_b,
        # 1x1 conv weight split by source group of the concatenated input
        w0_po=w0[:Co], w0_pp=w0[Co:2 * Co],
        w0_left=w0[2 * Co:2 * Co + 2 * F], w0_right=w0[2 * Co + 2 * F:],
        in0_g=in0_g, in0_b=in0_b,
        wc1=jnp.transpose(conv1_w, (2, 3, 1, 0)).reshape(9, Cb, Cb),       # OIHW -> HWIO -> (9,I,O)
        in1_g=in1_g, in1_b=in1_b,
        wc2=jnp.transpose(conv2_w, (2, 3, 1, 0)).reshape(9, Cb, Cb),
        in2_g=in2_g, in2_b=in2_b,
    )


if __name__ == "__main__":
    # Small spatial/sequence dims, module-default channel dims (lane-dense: 128 / 64 / 32).
    B, N, L = 2, 4, 16
    n_feat, n_feat_out, n_feat_proj = 64, 128, 32    # MSA2Pair(d_msa=64, d_pair=128, proj=32)

    key = jax.random.PRNGKey(0)
    k_msa, k_pair, k_params = jax.random.split(key, 3)
    msa = 0.5 * jax.random.normal(k_msa, (B, N, L, n_feat), jnp.float32)
    pair_orig = 0.5 * jax.random.normal(k_pair, (B, L, L, n_feat_out), jnp.float32)
    params = init_params(k_params, n_feat, n_feat_out, n_feat_proj)

    out = msa2pair_forward(msa, pair_orig, params, row_tile=8)
    out = jax.block_until_ready(out)
    assert out.shape == (B, L, L, n_feat_out)
    assert out.dtype == jnp.float32
    assert bool(jnp.all(jnp.isfinite(out)))
    print("KERNEL_OK")
</pallas_src>

<mosaic_0001>
module attributes {stable_mosaic.version = 11 : i64} {
  func.func @_msa_feat_kernel(%arg0: i32, %arg1: memref<1x4x16x64xf32, #tpu.memory_space<vmem>>, %arg2: memref<64x32xf32, #tpu.memory_space<vmem>>, %arg3: memref<1x32xf32, #tpu.memory_space<vmem>>, %arg4: memref<1x4x16x32xf32, #tpu.memory_space<vmem>>, %arg5: memref<1x16x128xf32, #tpu.memory_space<vmem>>) attributes {dimension_semantics = [#tpu.dimension_semantics<parallel>], iteration_bounds = array<i64: 2>, scalar_prefetch = 0 : i64, scratch_operands = 0 : i64, tpu.core_type = #tpu.core_type<tc>, window_params = [{transform_indices = @transform_0, window_bounds = array<i64: 1, 4, 16, 64>}, {pipeline_mode = #tpu.pipeline_mode<synchronous>, transform_indices = @transform_1, window_bounds = array<i64: 64, 32>}, {pipeline_mode = #tpu.pipeline_mode<synchronous>, transform_indices = @transform_2, window_bounds = array<i64: 1, 32>}, {transform_indices = @transform_3, window_bounds = array<i64: 1, 4, 16, 32>}, {transform_indices = @transform_4, window_bounds = array<i64: 1, 16, 128>}]} {
    %c0 = arith.constant 0 : index
    %c0_0 = arith.constant 0 : index
    %c0_1 = arith.constant 0 : index
    %c0_2 = arith.constant 0 : index
    %0 = vector.load %arg1[%c0, %c0_0, %c0_1, %c0_2] : memref<1x4x16x64xf32, #tpu.memory_space<vmem>>, vector<1x4x16x64xf32>
    %1 = vector.shape_cast %0 : vector<1x4x16x64xf32> to vector<4x16x64xf32>
    %2 = vector.shape_cast %1 : vector<4x16x64xf32> to vector<64x64xf32>
    %c0_3 = arith.constant 0 : index
    %c0_4 = arith.constant 0 : index
    %3 = vector.load %arg2[%c0_3, %c0_4] : memref<64x32xf32, #tpu.memory_space<vmem>>, vector<64x32xf32>
    %cst = arith.constant dense<0.000000e+00> : vector<64x32xf32>
    %4 = tpu.matmul %2, %3, %cst {dimension_numbers = #tpu.dot_dimension_numbers<[1], [0], [0], [1], [0, 0, 1, 1], [], []>} : vector<64x64xf32>, vector<64x32xf32>, vector<64x32xf32> -> vector<64x32xf32>
    %c0_5 = arith.constant 0 : index
    %c0_6 = arith.constant 0 : index
    %5 = vector.load %arg3[%c0_5, %c0_6] : memref<1x32xf32, #tpu.memory_space<vmem>>, vector<1x32xf32>
    %6 = vector.broadcast %5 : vector<1x32xf32> to vector<64x32xf32>
    %7 = arith.addf %4, %6 : vector<64x32xf32>
    %8 = vector.shape_cast %7 : vector<64x32xf32> to vector<4x16x32xf32>
    %c0_7 = arith.constant 0 : index
    %c0_8 = arith.constant 0 : index
    %c0_9 = arith.constant 0 : index
    %c0_10 = arith.constant 0 : index
    %9 = vector.load %arg4[%c0_7, %c0_8, %c0_9, %c0_10] : memref<1x4x16x32xf32, #tpu.memory_space<vmem>>, vector<1x4x16x32xf32>
    %10 = vector.shape_cast %9 : vector<1x4x16x32xf32> to vector<4x16x32xf32>
    %11 = vector.shape_cast %8 : vector<4x16x32xf32> to vector<1x4x16x32xf32>
    tpu.vector_store %arg4[%c0_7, %c0_8, %c0_9, %c0_10], %11 {strides = array<i32>} : memref<1x4x16x32xf32, #tpu.memory_space<vmem>>, vector<1x4x16x32xf32>,
    %cst_11 = arith.constant dense<0.000000e+00> : vector<16x64xf32>
    %12 = vector.multi_reduction <add>, %1, %cst_11 [0] : vector<4x16x64xf32> to vector<16x64xf32>
    %cst_12 = arith.constant 4.000000e+00 : f32
    %13 = vector.broadcast %cst_12 : f32 to vector<16x64xf32>
    %14 = arith.divf %12, %13 : vector<16x64xf32>
    %15 = vector.extract_strided_slice %1 {offsets = [0, 0, 0], sizes = [1, 16, 64], strides = [1, 1, 1]} : vector<4x16x64xf32> to vector<1x16x64xf32>
    %16 = vector.shape_cast %15 : vector<1x16x64xf32> to vector<16x64xf32>
    %17 = tpu.concatenate %14, %16 in 1 : vector<16x64xf32>, vector<16x64xf32> -> vector<16x128xf32>
    %c0_13 = arith.constant 0 : index
    %c0_14 = arith.constant 0 : index
    %c0_15 = arith.constant 0 : index
    %18 = vector.load %arg5[%c0_13, %c0_14, %c0_15] : memref<1x16x128xf32, #tpu.memory_space<vmem>>, vector<1x16x128xf32>
    %19 = vector.shape_cast %18 : vector<1x16x128xf32> to vector<16x128xf32>
    %20 = vector.shape_cast %17 : vector<16x128xf32> to vector<1x16x128xf32>
    tpu.vector_store %arg5[%c0_13, %c0_14, %c0_15], %20 {strides = array<i32>} : memref<1x16x128xf32, #tpu.memory_space<vmem>>, vector<1x16x128xf32>,
    return
  }
  func.func @transform_0(%arg0: i32) -> (i32, i32, i32, i32) {
    %c0_i32 = arith.constant 0 : i32
    %c0_i32_0 = arith.constant 0 : i32
    %c0_i32_1 = arith.constant 0 : i32
    %c0_i32_2 = arith.constant 0 : i32
    return %arg0, %c0_i32, %c0_i32_0, %c0_i32_1 : i32, i32, i32, i32
  }
  func.func @transform_1(%arg0: i32) -> (i32, i32) {
    %c0_i32 = arith.constant 0 : i32
    %c0_i32_0 = arith.constant 0 : i32
    %c0_i32_1 = arith.constant 0 : i32
    return %c0_i32, %c0_i32_0 : i32, i32
  }
  func.func @transform_2(%arg0: i32) -> (i32, i32) {
    %c0_i32 = arith.constant 0 : i32
    %c0_i32_0 = arith.constant 0 : i32
    %c0_i32_1 = arith.constant 0 : i32
    return %c0_i32, %c0_i32_0 : i32, i32
  }
  func.func @transform_3(%arg0: i32) -> (i32, i32, i32, i32) {
    %c0_i32 = arith.constant 0 : i32
    %c0_i32_0 = arith.constant 0 : i32
    %c0_i32_1 = arith.constant 0 : i32
    %c0_i32_2 = arith.constant 0 : i32
    return %arg0, %c0_i32, %c0_i32_0, %c0_i32_1 : i32, i32, i32, i32
  }
  func.func @transform_4(%arg0: i32) -> (i32, i32, i32) {
    %c0_i32 = arith.constant 0 : i32
    %c0_i32_0 = arith.constant 0 : i32
    %c0_i32_1 = arith.constant 0 : i32
    return %arg0, %c0_i32, %c0_i32_0 : i32, i32, i32
  }
}

</mosaic_0001>

<llo_original>
// kernel: tpu_custom_call.1
$region0: #{tpu_custom_call.1}
  #allocation0 [shape = 'u32[]', space=smem, size = 0x4, offset = 0x4, fixed_abs, tag = 'smem constant byte address 0x4 - core index']
  #allocation1 [shape = 'u32[144,128]{1,0:T(1,128)}', space=vmem, size = 0x12000, scoped, tag = 'internal scratch']
  %s0 = inlined_call_operand.hbm [shape: f32[2,4,16,64], index: 0, kind: input, shape index: {}]
  %s1 = inlined_call_operand.vmem [shape: f32[64,32], index: 1, kind: input, shape index: {}]
  %s2 = inlined_call_operand.vmem [shape: f32[1,32], index: 2, kind: input, shape index: {}]
  %s3 = inlined_call_operand.hbm [shape: f32[2,4,16,32], index: 3, kind: output, shape index: {0}]
  %s4 = inlined_call_operand.hbm [shape: f32[2,16,128], index: 4, kind: output, shape index: {1}]
  %5 = xla_tuple %s3, %s4
  %s6 = sld [smem:[#allocation0]]
  $region57: #{tpu_custom_call.1} parent=0
    _
  %s8 = ssub.s32 1, %s6
  %s9 = scalar_select 0, %s8, %s6
  $region1: #{tpu_custom_call.1} parent=0
    #allocation2 [shape = 'u8[65536]{0}', space=vmem, size = 0x10000, scoped, tag = 'input window, operand 0']
    #allocation3 [shape = 's32[2]{0}', space=sflag, size = 0x8, scoped, tag = 'scoped memory for tpu_custom_call.1']
    #allocation4 [shape = 's32[2]{0}', space=sflag, size = 0x8, scoped, tag = 'scoped memory for tpu_custom_call.1']
    #allocation5 [shape = 'u8[65536]{0}', space=vmem, size = 0x10000, scoped, tag = 'output window, operand 0']
    #allocation6 [shape = 'u8[16384]{0}', space=vmem, size = 0x4000, scoped, tag = 'output window, operand 1']
    #allocation7 [shape = 's32[2]{0}', space=sflag, size = 0x8, scoped, tag = 'scoped memory for tpu_custom_call.1']
    %10 = vsyncpa [#allocation3], 0
    %s11 = scalar_lea.sflag [#allocation3], 1
    %12 = vsyncpa %s11, 0
    %13 = vsyncpa [#allocation4], 0
    %s14 = scalar_lea.sflag [#allocation4], 1
    %15 = vsyncpa %s14, 0
    %16 = vsyncpa [#allocation7], 0
    %s17 = scalar_lea.sflag [#allocation7], 1
    %18 = vsyncpa %s17, 0
    loop: start=0, step=1, limit=4
    $region2: #{tpu_custom_call.1} parent=1 // loop_pre_header
      _
    $region3: #{tpu_custom_call.1} parent=1 // loop_header
      %s20 = sphi 0, %s24
      %p21 = scmp.ge.s32.totalorder %s20, 4
      %s30 = sphi 0, %s32
      %s33 = sphi 0, %s30
      %s34 = sphi 0, %s33
      %s50 = sphi 0, %s34
      %s54 = sphi 0, %s54
      %s56 = sphi 0, %s54
      %s57 = sphi 0, %s56
      %s71 = sphi 0, %s57
      %s75 = sphi 0, %s75
      %s77 = sphi 0, %s75
      %s78 = sphi 0, %s77
      %s92 = sphi 0, %s78
      %s98 = sphi 0, %s100
      %s101 = sphi 0, %s98
      %s102 = sphi 0, %s101
      %s118 = sphi 0, %s102
      %s124 = sphi 0, %s126
      %s127 = sphi 0, %s124
      %s128 = sphi 0, %s127
      %s144 = sphi 0, %s128
    $region4: #{tpu_custom_call.1} parent=1 // loop_header_branch
      %23 = sbr.rel (%p21) target = $region8
    $region5: #{tpu_custom_call.1} parent=1 // loop_body
      %s25 = ssub.s32 %s20, 1
      %s26 = ssub.s32 %s20, 2
      %s27 = sadd.s32 %s20, 1
      %s28 = ssub.s32 %s20, %s27
      %p29 = scmp.eq.s32.totalorder %s28, 0
      %s31 = sadd.s32 %s30, 1
      %s32 = scalar_select %p29, %s30, %s31
      %p35 = pneg %p29
      %p36 = scmp.eq.s32.totalorder %s20, 1
      %p37 = por %p35, %p36
      %p38 = scmp.ne.s32.totalorder %s30, %s33
      %p39 = scmp.eq.s32.totalorder %s20, 0
      %p40 = por %p38, %p39
      %p41 = scmp.ne.s32.totalorder %s30, %s33
      %p42 = scmp.eq.s32.totalorder %s25, 1
      %p43 = por %p41, %p42
      %p44 = scmp.ne.s32.totalorder %s33, %s34
      %p45 = scmp.eq.s32.totalorder %s25, 0
      %p46 = por %p44, %p45
      %p47 = scmp.ne.s32.totalorder %s33, %s34
      %p48 = scmp.eq.s32.totalorder %s26, 1
      %p49 = por %p47, %p48
      %p51 = scmp.ne.s32.totalorder %s34, %s50
      %p52 = scmp.eq.s32.totalorder %s26, 0
      %p53 = por %p51, %p52
      %s55 = sadd.s32 %s54, 1
      %p58 = scmp.eq.s32.totalorder %s20, 1
      %p59 = scmp.ne.s32.totalorder %s54, %s56
      %p60 = scmp.eq.s32.totalorder %s20, 0
      %p61 = por %p59, %p60
      %p62 = scmp.ne.s32.totalorder %s54, %s56
      %p63 = scmp.eq.s32.totalorder %s25, 1
      %p64 = por %p62, %p63
      %p65 = scmp.ne.s32.totalorder %s56, %s57
      %p66 = scmp.eq.s32.totalorder %s25, 0
      %p67 = por %p65, %p66
      %p68 = scmp.ne.s32.totalorder %s56, %s57
      %p69 = scmp.eq.s32.totalorder %s26, 1
      %p70 = por %p68, %p69
      %p72 = scmp.ne.s32.totalorder %s57, %s71
      %p73 = scmp.eq.s32.totalorder %s26, 0
      %p74 = por %p72, %p73
      %s76 = sadd.s32 %s75, 1
      %p79 = scmp.eq.s32.totalorder %s20, 1
      %p80 = scmp.ne.s32.totalorder %s75, %s77
      %p81 = scmp.eq.s32.totalorder %s20, 0
      %p82 = por %p80, %p81
      %p83 = scmp.ne.s32.totalorder %s75, %s77
      %p84 = scmp.eq.s32.totalorder %s25, 1
      %p85 = por %p83, %p84
      %p86 = scmp.ne.s32.totalorder %s77, %s78
      %p87 = scmp.eq.s32.totalorder %s25, 0
      %p88 = por %p86, %p87
      %p89 = scmp.ne.s32.totalorder %s77, %s78
      %p90 = scmp.eq.s32.totalorder %s26, 1
      %p91 = por %p89, %p90
      %p93 = scmp.ne.s32.totalorder %s78, %s92
      %p94 = scmp.eq.s32.totalorder %s26, 0
      %p95 = por %p93, %p94
      %s96 = ssub.s32 %s20, %s27
      %p97 = scmp.eq.s32.totalorder %s96, 0
      %s99 = sadd.s32 %s98, 1
      %s100 = scalar_select %p97, %s98, %s99
      %p103 = pneg %p97
      %p104 = scmp.eq.s32.totalorder %s20, 1
      %p105 = por %p103, %p104
      %p106 = scmp.ne.s32.totalorder %s98, %s101
      %p107 = scmp.eq.s32.totalorder %s20, 0
      %p108 = por %p106, %p107
      %p109 = scmp.ne.s32.totalorder %s98, %s101
      %p110 = scmp.eq.s32.totalorder %s25, 1
      %p111 = por %p109, %p110
      %p112 = scmp.ne.s32.totalorder %s101, %s102
      %p113 = scmp.eq.s32.totalorder %s25, 0
      %p114 = por %p112, %p113
      %p115 = scmp.ne.s32.totalorder %s101, %s102
      %p116 = scmp.eq.s32.totalorder %s26, 1
      %p117 = por %p115, %p116
      %p119 = scmp.ne.s32.totalorder %s102, %s118
      %p120 = scmp.eq.s32.totalorder %s26, 0
      %p121 = por %p119, %p120
      %s122 = ssub.s32 %s20, %s27
      %p123 = scmp.eq.s32.totalorder %s122, 0
      %s125 = sadd.s32 %s124, 1
      %s126 = scalar_select %p123, %s124, %s125
      %p129 = pneg %p123
      %p130 = scmp.eq.s32.totalorder %s20, 1
      %p131 = por %p129, %p130
      %p132 = scmp.ne.s32.totalorder %s124, %s127
      %p133 = scmp.eq.s32.totalorder %s20, 0
      %p134 = por %p132, %p133
      %p135 = scmp.ne.s32.totalorder %s124, %s127
      %p136 = scmp.eq.s32.totalorder %s25, 1
      %p137 = por %p135, %p136
      %p138 = scmp.ne.s32.totalorder %s127, %s128
      %p139 = scmp.eq.s32.totalorder %s25, 0
      %p140 = por %p138, %p139
      %p141 = scmp.ne.s32.totalorder %s127, %s128
      %p142 = scmp.eq.s32.totalorder %s26, 1
      %p143 = por %p141, %p142
      %p145 = scmp.ne.s32.totalorder %s128, %s144
      %p146 = scmp.eq.s32.totalorder %s26, 0
      %p147 = por %p145, %p146
      %p148 = scmp.le.s32.totalorder 1, %s20
      %p149 = scmp.lt.s32.totalorder %s20, 3
      %p150 = pnand %p148, %p149
      %p151 = pneg %p150
      // Predicated region
      $region9: #{tpu_custom_call.1} parent=5 // pred_check
        _
      $region10: #{tpu_custom_call.1} parent=5 // pred_check_branch
        %153 = sbr.rel (%p150) target = $region12
      $region11: #{tpu_custom_call.1} parent=5 // pred_region
        %s154 = ssub.s32 %s20, 1
        // Predicated region
        $region13: #{tpu_custom_call.1} parent=11 // pred_check
          %p155 = pneg %p67
        $region14: #{tpu_custom_call.1} parent=11 // pred_check_branch
          %157 = sbr.rel (%p155) target = $region16
        $region15: #{tpu_custom_call.1} parent=11 // pred_region
          _
        $region16: #{tpu_custom_call.1} parent=11 // pred_fallthru
          _
        // Predicated region
        $region17: #{tpu_custom_call.1} parent=11 // pred_check
          %p158 = pneg %p88
        $region18: #{tpu_custom_call.1} parent=11 // pred_check_branch
          %160 = sbr.rel (%p158) target = $region20
        $region19: #{tpu_custom_call.1} parent=11 // pred_region
          _
        $region20: #{tpu_custom_call.1} parent=11 // pred_fallthru
          _
      $region12: #{tpu_custom_call.1} parent=5 // pred_fallthru
        _
      %p161 = scmp.lt.s32.totalorder %s20, 2
      // Predicated region
      $region21: #{tpu_custom_call.1} parent=5 // pred_check
        %p162 = pneg %p161
      $region22: #{tpu_custom_call.1} parent=5 // pred_check_branch
        %164 = sbr.rel (%p162) target = $region24
      $region23: #{tpu_custom_call.1} parent=5 // pred_region
        // Predicated region
        $region25: #{tpu_custom_call.1} parent=23 // pred_check
          %p165 = pneg %p40
        $region26: #{tpu_custom_call.1} parent=23 // pred_check_branch
          %167 = sbr.rel (%p165) target = $region28
        $region27: #{tpu_custom_call.1} parent=23 // pred_region
          %s168 = sand.u32 %s30, 1
          %s169 = scalar_lea.sflag [#allocation3], %s168
          %s170 = sand.u32 %s30, 1
          %s171 = smul.addr %s170, 64
          %s172 = scalar_lea.vmem [#allocation2], %s171
          %s174 = ssub.s32 1024, 1024
          %175 = vsyncadd %s169, %s174
          %s176 = smul.addr %s20, 8
          %s177 = smul.addr %s176, 128
          %s178 = scalar_lea.hbm %s0, %s177
          %s179 = sshll.u32 %s172, 4
          %s180 = int_to_ptr.vmem [resolvable:$true] %s179
          %185 = dma.hbm_to_vmem [thread:$0]  %s178, 1024, %s180, %s169, 128, 128, 8
        $region28: #{tpu_custom_call.1} parent=23 // pred_fallthru
          _
      $region24: #{tpu_custom_call.1} parent=5 // pred_fallthru
        _
      %p186 = scmp.le.s32.totalorder 1, %s20
      %p187 = scmp.lt.s32.totalorder %s20, 3
      %p188 = pnand %p186, %p187
      %p189 = pneg %p188
      // Predicated region
      $region29: #{tpu_custom_call.1} parent=5 // pred_check
        _
      $region30: #{tpu_custom_call.1} parent=5 // pred_check_branch
        %191 = sbr.rel (%p188) target = $region32
      $region31: #{tpu_custom_call.1} parent=5 // pred_region
        %s192 = ssub.s32 %s20, 1
        %s193 = sand.u32 %s33, 1
        %s194 = scalar_lea.sflag [#allocation3], %s193
        %s195 = sand.u32 %s33, 1
        %s196 = smul.addr %s195, 64
        %s197 = scalar_lea.vmem [#allocation2], %s196
        // Predicated region
        $region33: #{tpu_custom_call.1} parent=31 // pred_check
          %p198 = pneg %p46
        $region34: #{tpu_custom_call.1} parent=31 // pred_check_branch
          %200 = sbr.rel (%p198) target = $region36
        $region35: #{tpu_custom_call.1} parent=31 // pred_region
          %201 = dma.done %s194, 1024
        $region36: #{tpu_custom_call.1} parent=31 // pred_fallthru
          _
        %s202 = sand.u32 %s33, 1
        %s203 = scalar_lea.sflag [#allocation3], %s202
        %s204 = sand.u32 %s33, 1
        %s205 = smul.addr %s204, 64
        %s206 = scalar_lea.vmem [#allocation2], %s205
        %p207 = pneg %p46
        %p208 = pneg %p43
        %p209 = pneg %p67
        %p210 = pneg %p64
        %p211 = pneg %p88
        %p212 = pneg %p85
        %p213 = pneg %p114
        %p214 = pneg %p111
        %s215 = sand.u32 %s101, 1
        %s216 = scalar_lea.sflag [#allocation4], %s215
        %s217 = sand.u32 %s101, 1
        %s218 = smul.addr %s217, 64
        %s219 = scalar_lea.vmem [#allocation5], %s218
        %p220 = pneg %p140
        %p221 = pneg %p137
        %s222 = sand.u32 %s127, 1
        %s223 = scalar_lea.sflag [#allocation7], %s222
        %s224 = sand.u32 %s127, 1
        %s225 = smul.addr %s224, 16
        %s226 = scalar_lea.vmem [#allocation6], %s225
        %v227 = vld [vmem:[%s197] sm:$0xff]
        %v228 = vld [vmem:[%s197 + $0x8] sm:$0xff]
        %v229 = vld [vmem:[%s197 + $0x10] sm:$0xff]
        %v230 = vld [vmem:[%s197 + $0x18] sm:$0xff]
        %v231 = vld [vmem:[%s197 + $0x20] sm:$0xff]
        %v232 = vld [vmem:[%s197 + $0x28] sm:$0xff]
        %v233 = vld [vmem:[%s197 + $0x30] sm:$0xff]
        %v234 = vld [vmem:[%s197 + $0x38] sm:$0xff]
        %v235 = vld [vmem:[%s1] sm:$0xff]
        %v236 = vld [vmem:[%s1 + $0x8] sm:$0xff]
        %v237 = vld [vmem:[%s1 + $0x10] sm:$0xff]
        %v238 = vld [vmem:[%s1 + $0x18] sm:$0xff]
        %v239 = vld [vmem:[%s1 + $0x20] sm:$0xff]
        %v240 = vld [vmem:[%s1 + $0x28] sm:$0xff]
        %v241 = vld [vmem:[%s1 + $0x30] sm:$0xff]
        %v242 = vld [vmem:[%s1 + $0x38] sm:$0xff]
        %v243 = vld [vmem:[%s2] sm:$0x1]
        %v245 = vlaneseq
        %v246 = vshrl.u32 %v245, 7
        %v247 = vsub.s32 0, %v246
        %v248 = vrot.slane %v243, %v247
        %vm250 = vcmask 523264
        %v252 = vsel %vm250, %v227, 0
        %v255 = vsel %vm250, %v228, 0
        %v258 = vsel %vm250, %v229, 0
        %v261 = vsel %vm250, %v230, 0
        %v264 = vsel %vm250, %v231, 0
        %v267 = vsel %vm250, %v232, 0
        %v270 = vsel %vm250, %v233, 0
        %v273 = vsel %vm250, %v234, 0
        %275 = vmatprep.subr.mxu0 0.0
        %276 = vmatpush1.msra.mxu0 %v235
        %277 = vmatprep.subr.mxu0 0.0
        %278 = vmatpush1.msra.mxu0 %v236
        %279 = vmatprep.subr.mxu0 0.0
        %280 = vmatpush1.msra.mxu0 %v237
        %281 = vmatprep.subr.mxu0 0.0
        %282 = vmatpush1.msra.mxu0 %v238
        %283 = vmatprep.subr.mxu0 0.0
        %284 = vmatpush1.msra.mxu0 %v239
        %285 = vmatprep.subr.mxu0 0.0
        %286 = vmatpush1.msra.mxu0 %v240
        %287 = vmatprep.subr.mxu0 0.0
        %288 = vmatpush1.msra.mxu0 %v241
        %289 = vmatprep.subr.mxu0 0.0
        %290 = vmatpush1.msra.mxu0 %v242
        %291 = vmatprep.subr.mxu0 0.0
        %292 = vmatpush1.msra.mxu0 0.0
        %293 = vmatprep.subr.mxu0 0.0
        %294 = vmatpush1.msra.mxu0 0.0
        %295 = vmatprep.subr.mxu0 0.0
        %296 = vmatpush1.msra.mxu0 0.0
        %297 = vmatprep.subr.mxu0 0.0
        %298 = vmatpush1.msra.mxu0 0.0
        %299 = vmatprep.subr.mxu0 0.0
        %300 = vmatpush1.msra.mxu0 0.0
        %301 = vmatprep.subr.mxu0 0.0
        %302 = vmatpush1.msra.mxu0 0.0
        %303 = vmatprep.subr.mxu0 0.0
        %304 = vmatpush1.msra.mxu0 0.0
        %305 = vmatprep.subr.mxu0 0.0
        %306 = vmatpush1.msra.mxu0 0.0
        %307 = vmatprep.subr.mxu0 0.0
        %308 = vmatpush1.msra.mxu0 0.0
        %309 = vmatprep.subr.mxu0 0.0
        %310 = vmatpush1.msra.mxu0 0.0
        %311 = vmatprep.subr.mxu0 0.0
        %312 = vmatpush1.msra.mxu0 0.0
        %313 = vmatprep.subr.mxu0 0.0
        %314 = vmatpush1.msra.mxu0 0.0
        %315 = vmatprep.subr.mxu0 0.0
        %316 = vmatpush1.msra.mxu0 0.0
        %317 = vmatprep.subr.mxu0 0.0
        %318 = vmatpush1.msra.mxu0 0.0
        %319 = vmatprep.subr.mxu0 0.0
        %320 = vmatpush1.msra.mxu0 0.0
        %321 = vmatprep.subr.mxu0 0.0
        %322 = vmatpush1.msra.mxu0 0.0
        %323 = vmatprep.subr.mxu0 0.0
        %324 = vmatpush1.msra.mxu0 0.0
        %325 = vmatprep.subr.mxu0 0.0
        %326 = vmatpush1.msra.mxu0 0.0
        %327 = vmatprep.subr.mxu0 0.0
        %328 = vmatpush1.msra.mxu0 0.0
        %329 = vmatprep.subr.mxu0 0.0
        %330 = vmatpush1.msra.mxu0 0.0
        %331 = vmatprep.subr.mxu0 0.0
        %332 = vmatpush1.msra.mxu0 0.0
        %333 = vmatprep.subr.mxu0 0.0
        %334 = vmatpush1.msra.mxu0 0.0
        %335 = vmatprep.subr.mxu0 0.0
        %336 = vmatpush1.msra.mxu0 0.0
        %337 = vmatprep.subr.mxu0 0.0
        %338 = vmatpush1.msra.mxu0 0.0
        %339 = vmatprep.mubr.f32.mxu0 0.0
        %340 = vmatmul.mubr.f32.gmra.mrb[0].mxu0 %v252
        %v341 = vpop.f32.mrb[0].mxu0
        %v342 = vadd.f32 %v248, %v341
        %v343 = vpop.f32.mrb[0].mxu0
        %344 = vmatprep.mubr.f32.mxu0 0.0
        %345 = vmatmul.mubr.f32.gmra.mrb[0].mxu0 %v255
        %v346 = vpop.f32.mrb[0].mxu0
        %v347 = vadd.f32 %v248, %v346
        %v348 = vpop.f32.mrb[0].mxu0
        %349 = vmatprep.mubr.f32.mxu0 0.0
        %350 = vmatmul.mubr.f32.gmra.mrb[0].mxu0 %v258
        %v351 = vpop.f32.mrb[0].mxu0
        %v352 = vadd.f32 %v248, %v351
        %v353 = vpop.f32.mrb[0].mxu0
        %354 = vmatprep.mubr.f32.mxu0 0.0
        %355 = vmatmul.mubr.f32.gmra.mrb[0].mxu0 %v261
        %v356 = vpop.f32.mrb[0].mxu0
        %v357 = vadd.f32 %v248, %v356
        %v358 = vpop.f32.mrb[0].mxu0
        %359 = vmatprep.mubr.f32.mxu0 0.0
        %360 = vmatmul.mubr.f32.gmra.mrb[0].mxu0 %v264
        %v361 = vpop.f32.mrb[0].mxu0
        %v362 = vadd.f32 %v248, %v361
        %v363 = vpop.f32.mrb[0].mxu0
        %364 = vmatprep.mubr.f32.mxu0 0.0
        %365 = vmatmul.mubr.f32.gmra.mrb[0].mxu0 %v267
        %v366 = vpop.f32.mrb[0].mxu0
        %v367 = vadd.f32 %v248, %v366
        %v368 = vpop.f32.mrb[0].mxu0
        %369 = vmatprep.mubr.f32.mxu0 0.0
        %370 = vmatmul.mubr.f32.gmra.mrb[0].mxu0 %v270
        %v371 = vpop.f32.mrb[0].mxu0
        %v372 = vadd.f32 %v248, %v371
        %v373 = vpop.f32.mrb[0].mxu0
        %374 = vmatprep.mubr.f32.mxu0 0.0
        %375 = vmatmul.mubr.f32.gmra.mrb[0].mxu0 %v273
        %v376 = vpop.f32.mrb[0].mxu0
        %v377 = vadd.f32 %v248, %v376
        %v378 = vpop.f32.mrb[0].mxu0
        %379 = vdwg.mxu0
        %vm380 = vcmask 261120
        %381 = vst.msk [vmem:[%s219] sm:$0xff] %vm380, %v342
        %382 = vst.msk [vmem:[%s219 + $0x8] sm:$0xff] %vm380, %v347
        %383 = vst.msk [vmem:[%s219 + $0x10] sm:$0xff] %vm380, %v352
        %384 = vst.msk [vmem:[%s219 + $0x18] sm:$0xff] %vm380, %v357
        %385 = vst.msk [vmem:[%s219 + $0x20] sm:$0xff] %vm380, %v362
        %386 = vst.msk [vmem:[%s219 + $0x28] sm:$0xff] %vm380, %v367
        %387 = vst.msk [vmem:[%s219 + $0x30] sm:$0xff] %vm380, %v372
        %388 = vst.msk [vmem:[%s219 + $0x38] sm:$0xff] %vm380, %v377
        %v389 = vsel %vm250, %v227, 0.0
        %v390 = vsel %vm250, %v229, 0.0
        %v391 = vadd.f32 %v389, %v390
        %v392 = vsel %vm250, %v231, 0.0
        %v393 = vadd.f32 %v391, %v392
        %v394 = vsel %vm250, %v233, 0.0
        %v395 = vadd.f32 %v393, %v394
        %v396 = vsel %vm250, %v228, 0.0
        %v397 = vsel %vm250, %v230, 0.0
        %v398 = vadd.f32 %v396, %v397
        %v399 = vsel %vm250, %v232, 0.0
        %v400 = vadd.f32 %v398, %v399
        %v401 = vsel %vm250, %v234, 0.0
        %v402 = vadd.f32 %v400, %v401
        %v403 = vrcp.pop 4.0
        %v404 = vmul.f32 %v395, %v403
        %v405 = vmul.f32 %v402, %v403
        %406 = vrot.lane.b32.xlu0 %v227, 64
        %v407 = vpop.permute.xlu0 %406
        %408 = vrot.lane.b32.xlu0 %v228, 64
        %v409 = vpop.permute.xlu0 %408
        %v412 = vsel %vm250, %v404, %v407
        %v413 = vsel %vm250, %v405, %v409
        %414 = vst [vmem:[%s226] sm:$0xff] %v412
        %415 = vst [vmem:[%s226 + $0x8] sm:$0xff] %v413
        %s416 = sand.u32 %s101, 1
        %s417 = scalar_lea.sflag [#allocation4], %s416
        %s418 = sand.u32 %s101, 1
        %s419 = smul.addr %s418, 64
        %s420 = scalar_lea.vmem [#allocation5], %s419
        %s421 = sand.u32 %s127, 1
        %s422 = scalar_lea.sflag [#allocation7], %s421
        %s423 = sand.u32 %s127, 1
        %s424 = smul.addr %s423, 16
        %s425 = scalar_lea.vmem [#allocation6], %s424
        // Predicated region
        $region37: #{tpu_custom_call.1} parent=31 // pred_check
          %p426 = pneg %p111
        $region38: #{tpu_custom_call.1} parent=31 // pred_check_branch
          %428 = sbr.rel (%p426) target = $region40
        $region39: #{tpu_custom_call.1} parent=31 // pred_region
          %s430 = ssub.s32 1024, 1024
          %431 = vsyncadd %s417, %s430
          %s432 = smul.addr %s25, 8
          %s433 = smul.addr %s432, 128
          %s434 = scalar_lea.hbm %s3, %s433
          %s435 = sshll.u32 %s420, 4
          %s436 = int_to_ptr.vmem [resolvable:$true] %s435
          %441 = dma.vmem_to_hbm [thread:$0]  %s436, 1024, %s434, %s417, 128, 128, 8
        $region40: #{tpu_custom_call.1} parent=31 // pred_fallthru
          _
        // Predicated region
        $region41: #{tpu_custom_call.1} parent=31 // pred_check
          %p442 = pneg %p137
        $region42: #{tpu_custom_call.1} parent=31 // pred_check_branch
          %444 = sbr.rel (%p442) target = $region44
        $region43: #{tpu_custom_call.1} parent=31 // pred_region
          %s446 = ssub.s32 256, 256
          %447 = vsyncadd %s422, %s446
          %s448 = smul.addr %s25, 2
          %s449 = smul.addr %s448, 128
          %s450 = scalar_lea.hbm %s4, %s449
          %s451 = sshll.u32 %s425, 4
          %s452 = int_to_ptr.vmem [resolvable:$true] %s451
          %457 = dma.vmem_to_hbm [thread:$0]  %s452, 256, %s450, %s422, 128, 128, 8
        $region44: #{tpu_custom_call.1} parent=31 // pred_fallthru
          _
      $region32: #{tpu_custom_call.1} parent=5 // pred_fallthru
        _
      %p458 = scmp.le.s32.totalorder 2, %s20
      // Predicated region
      $region45: #{tpu_custom_call.1} parent=5 // pred_check
        %p459 = pneg %p458
      $region46: #{tpu_custom_call.1} parent=5 // pred_check_branch
        %461 = sbr.rel (%p459) target = $region48
      $region47: #{tpu_custom_call.1} parent=5 // pred_region
        %s462 = ssub.s32 %s20, 2
        // Predicated region
        $region49: #{tpu_custom_call.1} parent=47 // pred_check
          %p463 = pneg %p117
        $region50: #{tpu_custom_call.1} parent=47 // pred_check_branch
          %465 = sbr.rel (%p463) target = $region52
        $region51: #{tpu_custom_call.1} parent=47 // pred_region
          %s466 = sand.u32 %s102, 1
          %s467 = scalar_lea.sflag [#allocation4], %s466
          %s468 = sand.u32 %s102, 1
          %s469 = smul.addr %s468, 64
          %s470 = scalar_lea.vmem [#allocation5], %s469
          %471 = dma.done %s467, 1024
        $region52: #{tpu_custom_call.1} parent=47 // pred_fallthru
          _
        // Predicated region
        $region53: #{tpu_custom_call.1} parent=47 // pred_check
          %p472 = pneg %p143
        $region54: #{tpu_custom_call.1} parent=47 // pred_check_branch
          %474 = sbr.rel (%p472) target = $region56
        $region55: #{tpu_custom_call.1} parent=47 // pred_region
          %s475 = sand.u32 %s128, 1
          %s476 = scalar_lea.sflag [#allocation7], %s475
          %s477 = sand.u32 %s128, 1
          %s478 = smul.addr %s477, 16
          %s479 = scalar_lea.vmem [#allocation6], %s478
          %480 = dma.done %s476, 256
        $region56: #{tpu_custom_call.1} parent=47 // pred_fallthru
          _
      $region48: #{tpu_custom_call.1} parent=5 // pred_fallthru
        _
    $region6: #{tpu_custom_call.1} parent=1 // loop_footer
      %s24 = sadd.s32 1, %s20
    $region7: #{tpu_custom_call.1} parent=1 // loop_footer_branch
      %19 = sbr.rel target = $region3
    $region8: #{tpu_custom_call.1} parent=1 // loop_exit
      _
    %481 = vsyncpa [#allocation3], 1
    %s482 = scalar_lea.sflag [#allocation3], 1
    %483 = vsyncpa %s482, 1
    %484 = vsyncpa [#allocation4], 1
    %s485 = scalar_lea.sflag [#allocation4], 1
    %486 = vsyncpa %s485, 1
    %487 = vsyncpa [#allocation7], 1
    %s488 = scalar_lea.sflag [#allocation7], 1
    %489 = vsyncpa %s488, 1

</llo_original>
